<compile_context>
chip_gen: v7x
topology: tpu7x:2x2x1
jax: 0.10.0
libtpu: 0.0.40
codegen_flags: <defaults>
</compile_context>

<pallas_src>
import functools

import jax
import jax.numpy as jnp
from jax.experimental import pallas as pl
from jax.experimental.pallas import tpu as pltpu


# ---------------------------------------------------------------------------
# Streaming backbone: conv1..conv5 (+folded BN, ReLU) and global max over N.
# ---------------------------------------------------------------------------
def _backbone_kernel(
    x_ref,            # (BT, 3, TN) f32   channel-major, lane-dense point tile
    w1_ref, b1_ref,   # (3, 64)  f32, (1, 64)  f32   conv1+bn1
    w2_ref, b2_ref,   # (64, 64) bf16,(1, 64)  f32   conv2+bn2
    w3_ref, b3_ref,   # (64, 64) bf16,(1, 64)  f32   conv3+bn3
    w4_ref, b4_ref,   # (64,128) bf16,(1, 128) f32   conv4+bn4
    w5_ref, b5_ref,   # (128, E) bf16,(1, E)   f32   conv5+bn5
    o_ref,            # (1, BT, E) f32   per-batch global max (resident over ni)
    gmax_ref,         # VMEM scratch (BT, E) f32 — running max over point tiles
    *, n_valid, needs_mask,
):
    ni = pl.program_id(1)
    num_n = pl.num_programs(1)

    BT = x_ref.shape[0]
    TN = x_ref.shape[2]
    E = w5_ref.shape[1]

    @pl.when(ni == 0)
    def _init():
        gmax_ref[...] = jnp.full(gmax_ref.shape, -jnp.inf, gmax_ref.dtype)

    x = x_ref[...]            # (BT, 3, TN) f32
    w1 = w1_ref[...]          # (3, 64) f32

    # conv1 + bn1 on the MXU: contract the 3-channel (sublane) axis per batch
    # row; this also performs the points-in-lanes -> points-in-sublanes move.
    hs = []
    for b in range(BT):       # BT is small and static
        hb = jax.lax.dot_general(
            x[b], w1,
            dimension_numbers=(((0,), (0,)), ((), ())),
            preferred_element_type=jnp.float32)        # (TN, 64)
        hs.append(hb)
    h = hs[0] if BT == 1 else jnp.concatenate(hs, axis=0)   # (M, 64)
    h = jnp.maximum(h + b1_ref[...], 0.0)

    def mm_relu(a, w_ref, b_ref):
        y = jnp.dot(a.astype(jnp.bfloat16), w_ref[...],
                    preferred_element_type=jnp.float32)
        return jnp.maximum(y + b_ref[...], 0.0)

    h = mm_relu(h, w2_ref, b2_ref)                     # (M, 64)
    h = mm_relu(h, w3_ref, b3_ref)                     # (M, 64)
    h = mm_relu(h, w4_ref, b4_ref)                     # (M, 128)
    h = mm_relu(h, w5_ref, b5_ref)                     # (M, E)

    # adaptive_max_pool1d(., 1): running max over the point axis, per batch row.
    h3 = h.reshape(BT, TN, E)
    if needs_mask:
        pt = jax.lax.broadcasted_iota(jnp.int32, (BT, TN, E), 1) + ni * TN
        h3 = jnp.where(pt < n_valid, h3, -jnp.inf)
    tile_max = jnp.max(h3, axis=1)                     # (BT, E)
    gmax_ref[...] = jnp.maximum(gmax_ref[...], tile_max)

    @pl.when(ni == num_n - 1)
    def _emit():
        o_ref[0] = gmax_ref[...]


# ---------------------------------------------------------------------------
# Classifier head: linear1+bn6+ReLU, (dropout = identity), linear2.
# ---------------------------------------------------------------------------
def _head_kernel(g_ref, w6_ref, b6_ref, w7_ref, b7_ref, o_ref):
    g = g_ref[...]                                     # (B, E) f32
    f = jnp.dot(g.astype(jnp.bfloat16), w6_ref[...],
                preferred_element_type=jnp.float32) + b6_ref[...]
    f = jnp.maximum(f, 0.0)                            # (B, 512)
    # self.dp1 (Dropout) is identity at inference.
    out = jnp.dot(f.astype(jnp.bfloat16), w7_ref[...],
                  preferred_element_type=jnp.float32) + b7_ref[...]
    o_ref[...] = out                                   # (B, OCp) lane-dense


# ---------------------------------------------------------------------------
# Parameter folding / tiling helpers.
# ---------------------------------------------------------------------------
def _fold_bn(weight_oc_ic, gamma, beta, mean, var, eps=1e-5,
             w_dtype=jnp.bfloat16):
    """Fold a bias-free matmul (weight: (C_out, C_in)) with eval-mode BN.

    Returns (W_folded: (C_in, C_out), b_folded: (1, C_out)) so that
        relu(bn(x @ W.T)) == relu(x @ W_folded + b_folded).
    """
    scale = gamma / jnp.sqrt(var + eps)                # (C_out,)
    shift = beta - mean * scale                        # (C_out,)
    w_f = (weight_oc_ic.T * scale[None, :]).astype(w_dtype)
    b_f = shift[None, :].astype(jnp.float32)
    return w_f, b_f


def _choose_point_tile(n, max_tile=2048):
    """Point tile: full N if small enough, else a multiple of 128 (N is padded
    up to a multiple of the tile in the wrapper when it does not divide)."""
    if n <= max_tile:
        return n
    t = (max_tile // 128) * 128
    for cand in range(t, 127, -128):   # prefer an even tiling if one exists
        if n % cand == 0:
            return cand
    return t                           # pad + mask in the wrapper/kernel


def _choose_batch_tile(b, tn, target_rows=2048):
    """Batch several point clouds per step so M = BT*TN approaches target_rows,
    while keeping >= 2 steps on the 'parallel' batch axis (v7x has 2 TCs)."""
    if tn % 8 != 0:
        return 1                       # keep the (M, E) reshape tile-aligned
    want = max(1, target_rows // tn)
    if b >= 2:
        want = min(want, b // 2)
    bt = 1
    for d in range(1, min(b, want) + 1):
        if b % d == 0:
            bt = d
    return bt


# ---------------------------------------------------------------------------
# Forward wrapper.
# ---------------------------------------------------------------------------
def pointnet_forward(x_bcn, params, output_channels, *, point_tile=2048):
    """x_bcn: (B, 3, N) float32, PyTorch Conv1d layout. Returns (B, OC)."""
    B, C, N = x_bcn.shape
    assert C == 3

    (w1, b1), (w2, b2), (w3, b3), (w4, b4), (w5, b5), (w6, b6), (w7, b7) = params
    E = w5.shape[1]
    OCp = w7.shape[1]                  # padded to a multiple of 128

    TN = _choose_point_tile(N, point_tile)
    n_pad = ((N + TN - 1) // TN) * TN
    needs_mask = n_pad != N

    x = x_bcn.astype(jnp.float32)
    if needs_mask:
        x = jnp.pad(x, ((0, 0), (0, 0), (0, n_pad - N)))

    BT = _choose_batch_tile(B, TN)
    assert n_pad % TN == 0 and B % BT == 0
    nb, nn = B // BT, n_pad // TN

    conv_params = params[:5]
    flat = [x]
    for w, bias in conv_params:
        flat += [w, bias]

    in_specs = [pl.BlockSpec((BT, 3, TN), lambda bi, ni: (bi, 0, ni))]
    for w, bias in conv_params:        # grid-invariant weights/biases
        in_specs.append(pl.BlockSpec(w.shape, lambda bi, ni: (0, 0)))
        in_specs.append(pl.BlockSpec(bias.shape, lambda bi, ni: (0, 0)))

    kernel = functools.partial(_backbone_kernel, n_valid=N,
                               needs_mask=needs_mask)

    gmax = pl.pallas_call(
        kernel,
        out_shape=jax.ShapeDtypeStruct((nb, BT, E), jnp.float32),
        grid_spec=pltpu.PrefetchScalarGridSpec(
            num_scalar_prefetch=0,
            grid=(nb, nn),
            in_specs=in_specs,
            out_specs=pl.BlockSpec((1, BT, E), lambda bi, ni: (bi, 0, 0)),
            scratch_shapes=[pltpu.VMEM((BT, E), jnp.float32)],
        ),
        compiler_params=pltpu.CompilerParams(
            dimension_semantics=("parallel", "arbitrary"),
            # Tiles are sized so this fits v7x (64 MiB physical) and is loose
            # enough for the larger tiles on v5e/v6e (128 MiB physical).
            vmem_limit_bytes=48 * 1024 * 1024,
        ),
    )(*flat)

    gmax = gmax.reshape(B, E)          # (B, E) global max features

    out = pl.pallas_call(
        _head_kernel,
        out_shape=jax.ShapeDtypeStruct((B, OCp), jnp.float32),
    )(gmax, w6, b6, w7, b7)

    return out[:, :output_channels]


# ---------------------------------------------------------------------------
# Deterministic synthetic parameters matching PointNet.__init__ shapes.
# ---------------------------------------------------------------------------
def make_params(key, emb_dims=64, output_channels=40):
    keys = iter(jax.random.split(key, 32))

    def conv_w(cout, cin):
        # nn.Conv1d(cin, cout, 1, bias=False).weight -> (cout, cin)
        return 0.1 * jax.random.normal(next(keys), (cout, cin), jnp.float32)

    def bn(c):
        gamma = 1.0 + 0.1 * jax.random.normal(next(keys), (c,), jnp.float32)
        beta = 0.05 * jax.random.normal(next(keys), (c,), jnp.float32)
        mean = jnp.zeros((c,), jnp.float32)   # default running_mean
        var = jnp.ones((c,), jnp.float32)     # default running_var
        return gamma, beta, mean, var

    layers = []
    dims = [(64, 3), (64, 64), (64, 64), (128, 64), (emb_dims, 128)]
    for idx, (cout, cin) in enumerate(dims):
        w = conv_w(cout, cin)
        # conv1's folded weight stays f32 (f32 MXU pass; coords keep precision).
        w_dtype = jnp.float32 if idx == 0 else jnp.bfloat16
        layers.append(_fold_bn(w, *bn(cout), w_dtype=w_dtype))

    # linear1 (bias=False) + bn6
    w6 = 0.1 * jax.random.normal(next(keys), (512, emb_dims), jnp.float32)
    layers.append(_fold_bn(w6, *bn(512), w_dtype=jnp.bfloat16))

    # linear2 (bias=True), padded to a multiple of 128 output lanes.
    ocp = max(128, ((output_channels + 127) // 128) * 128)
    w7 = 0.1 * jax.random.normal(next(keys), (output_channels, 512), jnp.float32)
    b7 = 0.05 * jax.random.normal(next(keys), (output_channels,), jnp.float32)
    w7p = jnp.zeros((512, ocp), jnp.float32).at[:, :output_channels].set(w7.T)
    b7p = jnp.zeros((1, ocp), jnp.float32).at[0, :output_channels].set(b7)
    layers.append((w7p.astype(jnp.bfloat16), b7p))

    return tuple(layers)


if __name__ == "__main__":
    key = jax.random.PRNGKey(0)
    k_params, k_x = jax.random.split(key)

    B, N = 2, 16            # batch=2, 16 points (toy sizes)
    EMB, OC = 64, 40        # args.emb_dims = 64 (small), output_channels = 40

    params = make_params(k_params, emb_dims=EMB, output_channels=OC)
    x = jax.random.normal(k_x, (B, 3, N), jnp.float32)   # PyTorch (B, C, N)

    out = pointnet_forward(x, params, output_channels=OC)
    jax.block_until_ready(out)
    assert out.shape == (B, OC), out.shape
    print("KERNEL_OK")
</pallas_src>

<mosaic_0001>
module attributes {stable_mosaic.version = 11 : i64} {
  func.func @_backbone_kernel(%arg0: i32, %arg1: i32, %arg2: memref<1x3x16xf32, #tpu.memory_space<vmem>>, %arg3: memref<3x64xf32, #tpu.memory_space<vmem>>, %arg4: memref<1x64xf32, #tpu.memory_space<vmem>>, %arg5: memref<64x64xbf16, #tpu.memory_space<vmem>>, %arg6: memref<1x64xf32, #tpu.memory_space<vmem>>, %arg7: memref<64x64xbf16, #tpu.memory_space<vmem>>, %arg8: memref<1x64xf32, #tpu.memory_space<vmem>>, %arg9: memref<64x128xbf16, #tpu.memory_space<vmem>>, %arg10: memref<1x128xf32, #tpu.memory_space<vmem>>, %arg11: memref<128x64xbf16, #tpu.memory_space<vmem>>, %arg12: memref<1x64xf32, #tpu.memory_space<vmem>>, %arg13: memref<1x1x64xf32, #tpu.memory_space<vmem>>, %arg14: memref<1x64xf32, #tpu.memory_space<vmem>>) attributes {dimension_semantics = [#tpu.dimension_semantics<parallel>, #tpu.dimension_semantics<arbitrary>], iteration_bounds = array<i64: 2, 1>, scalar_prefetch = 0 : i64, scratch_operands = 1 : i64, tpu.core_type = #tpu.core_type<tc>, window_params = [{transform_indices = @transform_0, window_bounds = array<i64: 1, 3, 16>}, {pipeline_mode = #tpu.pipeline_mode<synchronous>, transform_indices = @transform_1, window_bounds = array<i64: 3, 64>}, {pipeline_mode = #tpu.pipeline_mode<synchronous>, transform_indices = @transform_2, window_bounds = array<i64: 1, 64>}, {pipeline_mode = #tpu.pipeline_mode<synchronous>, transform_indices = @transform_3, window_bounds = array<i64: 64, 64>}, {pipeline_mode = #tpu.pipeline_mode<synchronous>, transform_indices = @transform_4, window_bounds = array<i64: 1, 64>}, {pipeline_mode = #tpu.pipeline_mode<synchronous>, transform_indices = @transform_5, window_bounds = array<i64: 64, 64>}, {pipeline_mode = #tpu.pipeline_mode<synchronous>, transform_indices = @transform_6, window_bounds = array<i64: 1, 64>}, {pipeline_mode = #tpu.pipeline_mode<synchronous>, transform_indices = @transform_7, window_bounds = array<i64: 64, 128>}, {pipeline_mode = #tpu.pipeline_mode<synchronous>, transform_indices = @transform_8, window_bounds = array<i64: 1, 128>}, {pipeline_mode = #tpu.pipeline_mode<synchronous>, transform_indices = @transform_9, window_bounds = array<i64: 128, 64>}, {pipeline_mode = #tpu.pipeline_mode<synchronous>, transform_indices = @transform_10, window_bounds = array<i64: 1, 64>}, {transform_indices = @transform_11, window_bounds = array<i64: 1, 1, 64>}]} {
    %c0_i32 = arith.constant 0 : i32
    %0 = arith.cmpi eq, %arg1, %c0_i32 : i32
    %1 = arith.extui %0 : i1 to i32
    %c0_i32_0 = arith.constant 0 : i32
    %2 = arith.cmpi ne, %1, %c0_i32_0 : i32
    scf.if %2 {
      %cst_39 = arith.constant 0xFF800000 : f32
      %52 = vector.broadcast %cst_39 : f32 to vector<1x64xf32>
      %c0_40 = arith.constant 0 : index
      %c0_41 = arith.constant 0 : index
      %53 = vector.load %arg14[%c0_40, %c0_41] : memref<1x64xf32, #tpu.memory_space<vmem>>, vector<1x64xf32>
      tpu.vector_store %arg14[%c0_40, %c0_41], %52 {strides = array<i32>} : memref<1x64xf32, #tpu.memory_space<vmem>>, vector<1x64xf32>,
    } else {
    }
    %c0 = arith.constant 0 : index
    %c0_1 = arith.constant 0 : index
    %c0_2 = arith.constant 0 : index
    %3 = vector.load %arg2[%c0, %c0_1, %c0_2] : memref<1x3x16xf32, #tpu.memory_space<vmem>>, vector<1x3x16xf32>
    %c0_3 = arith.constant 0 : index
    %c0_4 = arith.constant 0 : index
    %4 = vector.load %arg3[%c0_3, %c0_4] : memref<3x64xf32, #tpu.memory_space<vmem>>, vector<3x64xf32>
    %5 = vector.shape_cast %3 : vector<1x3x16xf32> to vector<3x16xf32>
    %cst = arith.constant dense<0.000000e+00> : vector<16x64xf32>
    %6 = tpu.matmul %5, %4, %cst {dimension_numbers = #tpu.dot_dimension_numbers<[0], [0], [1], [1], [0, 1, 1, 1], [], []>} : vector<3x16xf32>, vector<3x64xf32>, vector<16x64xf32> -> vector<16x64xf32>
    %c0_5 = arith.constant 0 : index
    %c0_6 = arith.constant 0 : index
    %7 = vector.load %arg4[%c0_5, %c0_6] : memref<1x64xf32, #tpu.memory_space<vmem>>, vector<1x64xf32>
    %8 = vector.broadcast %7 : vector<1x64xf32> to vector<16x64xf32>
    %9 = arith.addf %6, %8 : vector<16x64xf32>
    %cst_7 = arith.constant 0.000000e+00 : f32
    %10 = vector.broadcast %cst_7 : f32 to vector<16x64xf32>
    %11 = arith.maximumf %9, %10 : vector<16x64xf32>
    %12 = arith.truncf %11 : vector<16x64xf32> to vector<16x64xbf16>
    %c0_8 = arith.constant 0 : index
    %c0_9 = arith.constant 0 : index
    %13 = vector.load %arg5[%c0_8, %c0_9] : memref<64x64xbf16, #tpu.memory_space<vmem>>, vector<64x64xbf16>
    %cst_10 = arith.constant dense<0.000000e+00> : vector<16x64xf32>
    %14 = tpu.matmul %12, %13, %cst_10 {dimension_numbers = #tpu.dot_dimension_numbers<[1], [0], [0], [1], [0, 0, 1, 1], [], []>} : vector<16x64xbf16>, vector<64x64xbf16>, vector<16x64xf32> -> vector<16x64xf32>
    %c0_11 = arith.constant 0 : index
    %c0_12 = arith.constant 0 : index
    %15 = vector.load %arg6[%c0_11, %c0_12] : memref<1x64xf32, #tpu.memory_space<vmem>>, vector<1x64xf32>
    %16 = vector.broadcast %15 : vector<1x64xf32> to vector<16x64xf32>
    %17 = arith.addf %14, %16 : vector<16x64xf32>
    %cst_13 = arith.constant 0.000000e+00 : f32
    %18 = vector.broadcast %cst_13 : f32 to vector<16x64xf32>
    %19 = arith.maximumf %17, %18 : vector<16x64xf32>
    %20 = arith.truncf %19 : vector<16x64xf32> to vector<16x64xbf16>
    %c0_14 = arith.constant 0 : index
    %c0_15 = arith.constant 0 : index
    %21 = vector.load %arg7[%c0_14, %c0_15] : memref<64x64xbf16, #tpu.memory_space<vmem>>, vector<64x64xbf16>
    %cst_16 = arith.constant dense<0.000000e+00> : vector<16x64xf32>
    %22 = tpu.matmul %20, %21, %cst_16 {dimension_numbers = #tpu.dot_dimension_numbers<[1], [0], [0], [1], [0, 0, 1, 1], [], []>} : vector<16x64xbf16>, vector<64x64xbf16>, vector<16x64xf32> -> vector<16x64xf32>
    %c0_17 = arith.constant 0 : index
    %c0_18 = arith.constant 0 : index
    %23 = vector.load %arg8[%c0_17, %c0_18] : memref<1x64xf32, #tpu.memory_space<vmem>>, vector<1x64xf32>
    %24 = vector.broadcast %23 : vector<1x64xf32> to vector<16x64xf32>
    %25 = arith.addf %22, %24 : vector<16x64xf32>
    %cst_19 = arith.constant 0.000000e+00 : f32
    %26 = vector.broadcast %cst_19 : f32 to vector<16x64xf32>
    %27 = arith.maximumf %25, %26 : vector<16x64xf32>
    %28 = arith.truncf %27 : vector<16x64xf32> to vector<16x64xbf16>
    %c0_20 = arith.constant 0 : index
    %c0_21 = arith.constant 0 : index
    %29 = vector.load %arg9[%c0_20, %c0_21] : memref<64x128xbf16, #tpu.memory_space<vmem>>, vector<64x128xbf16>
    %cst_22 = arith.constant dense<0.000000e+00> : vector<16x128xf32>
    %30 = tpu.matmul %28, %29, %cst_22 {dimension_numbers = #tpu.dot_dimension_numbers<[1], [0], [0], [1], [0, 0, 1, 1], [], []>} : vector<16x64xbf16>, vector<64x128xbf16>, vector<16x128xf32> -> vector<16x128xf32>
    %c0_23 = arith.constant 0 : index
    %c0_24 = arith.constant 0 : index
    %31 = vector.load %arg10[%c0_23, %c0_24] : memref<1x128xf32, #tpu.memory_space<vmem>>, vector<1x128xf32>
    %32 = vector.broadcast %31 : vector<1x128xf32> to vector<16x128xf32>
    %33 = arith.addf %30, %32 : vector<16x128xf32>
    %cst_25 = arith.constant 0.000000e+00 : f32
    %34 = vector.broadcast %cst_25 : f32 to vector<16x128xf32>
    %35 = arith.maximumf %33, %34 : vector<16x128xf32>
    %36 = arith.truncf %35 : vector<16x128xf32> to vector<16x128xbf16>
    %c0_26 = arith.constant 0 : index
    %c0_27 = arith.constant 0 : index
    %37 = vector.load %arg11[%c0_26, %c0_27] : memref<128x64xbf16, #tpu.memory_space<vmem>>, vector<128x64xbf16>
    %cst_28 = arith.constant dense<0.000000e+00> : vector<16x64xf32>
    %38 = tpu.matmul %36, %37, %cst_28 {dimension_numbers = #tpu.dot_dimension_numbers<[1], [0], [0], [1], [0, 0, 1, 1], [], []>} : vector<16x128xbf16>, vector<128x64xbf16>, vector<16x64xf32> -> vector<16x64xf32>
    %c0_29 = arith.constant 0 : index
    %c0_30 = arith.constant 0 : index
    %39 = vector.load %arg12[%c0_29, %c0_30] : memref<1x64xf32, #tpu.memory_space<vmem>>, vector<1x64xf32>
    %40 = vector.broadcast %39 : vector<1x64xf32> to vector<16x64xf32>
    %41 = arith.addf %38, %40 : vector<16x64xf32>
    %cst_31 = arith.constant 0.000000e+00 : f32
    %42 = vector.broadcast %cst_31 : f32 to vector<16x64xf32>
    %43 = arith.maximumf %41, %42 : vector<16x64xf32>
    %44 = vector.shape_cast %43 : vector<16x64xf32> to vector<1x16x64xf32>
    %cst_32 = arith.constant dense<0xFF800000> : vector<1x64xf32>
    %45 = vector.multi_reduction <maximumf>, %44, %cst_32 [1] : vector<1x16x64xf32> to vector<1x64xf32>
    %c0_33 = arith.constant 0 : index
    %c0_34 = arith.constant 0 : index
    %46 = vector.load %arg14[%c0_33, %c0_34] : memref<1x64xf32, #tpu.memory_space<vmem>>, vector<1x64xf32>
    %47 = arith.maximumf %46, %45 : vector<1x64xf32>
    %c0_35 = arith.constant 0 : index
    %c0_36 = arith.constant 0 : index
    %48 = vector.load %arg14[%c0_35, %c0_36] : memref<1x64xf32, #tpu.memory_space<vmem>>, vector<1x64xf32>
    tpu.vector_store %arg14[%c0_35, %c0_36], %47 {strides = array<i32>} : memref<1x64xf32, #tpu.memory_space<vmem>>, vector<1x64xf32>,
    %c0_i32_37 = arith.constant 0 : i32
    %49 = arith.cmpi eq, %arg1, %c0_i32_37 : i32
    %50 = arith.extui %49 : i1 to i32
    %c0_i32_38 = arith.constant 0 : i32
    %51 = arith.cmpi ne, %50, %c0_i32_38 : i32
    scf.if %51 {
      %c0_39 = arith.constant 0 : index
      %c0_40 = arith.constant 0 : index
      %52 = vector.load %arg14[%c0_39, %c0_40] : memref<1x64xf32, #tpu.memory_space<vmem>>, vector<1x64xf32>
      %c0_41 = arith.constant 0 : index
      %c0_42 = arith.constant 0 : index
      %c0_43 = arith.constant 0 : index
      %53 = vector.load %arg13[%c0_41, %c0_42, %c0_43] : memref<1x1x64xf32, #tpu.memory_space<vmem>>, vector<1x1x64xf32>
      %54 = vector.shape_cast %53 : vector<1x1x64xf32> to vector<1x64xf32>
      %55 = vector.shape_cast %52 : vector<1x64xf32> to vector<1x1x64xf32>
      tpu.vector_store %arg13[%c0_41, %c0_42, %c0_43], %55 {strides = array<i32>} : memref<1x1x64xf32, #tpu.memory_space<vmem>>, vector<1x1x64xf32>,
    } else {
    }
    return
  }
  func.func @transform_0(%arg0: i32, %arg1: i32) -> (i32, i32, i32) {
    %c0_i32 = arith.constant 0 : i32
    %c0_i32_0 = arith.constant 0 : i32
    return %arg0, %c0_i32, %arg1 : i32, i32, i32
  }
  func.func @transform_1(%arg0: i32, %arg1: i32) -> (i32, i32) {
    %c0_i32 = arith.constant 0 : i32
    %c0_i32_0 = arith.constant 0 : i32
    %c0_i32_1 = arith.constant 0 : i32
    return %c0_i32, %c0_i32_0 : i32, i32
  }
  func.func @transform_2(%arg0: i32, %arg1: i32) -> (i32, i32) {
    %c0_i32 = arith.constant 0 : i32
    %c0_i32_0 = arith.constant 0 : i32
    %c0_i32_1 = arith.constant 0 : i32
    return %c0_i32, %c0_i32_0 : i32, i32
  }
  func.func @transform_3(%arg0: i32, %arg1: i32) -> (i32, i32) {
    %c0_i32 = arith.constant 0 : i32
    %c0_i32_0 = arith.constant 0 : i32
    %c0_i32_1 = arith.constant 0 : i32
    return %c0_i32, %c0_i32_0 : i32, i32
  }
  func.func @transform_4(%arg0: i32, %arg1: i32) -> (i32, i32) {
    %c0_i32 = arith.constant 0 : i32
    %c0_i32_0 = arith.constant 0 : i32
    %c0_i32_1 = arith.constant 0 : i32
    return %c0_i32, %c0_i32_0 : i32, i32
  }
  func.func @transform_5(%arg0: i32, %arg1: i32) -> (i32, i32) {
    %c0_i32 = arith.constant 0 : i32
    %c0_i32_0 = arith.constant 0 : i32
    %c0_i32_1 = arith.constant 0 : i32
    return %c0_i32, %c0_i32_0 : i32, i32
  }
  func.func @transform_6(%arg0: i32, %arg1: i32) -> (i32, i32) {
    %c0_i32 = arith.constant 0 : i32
    %c0_i32_0 = arith.constant 0 : i32
    %c0_i32_1 = arith.constant 0 : i32
    return %c0_i32, %c0_i32_0 : i32, i32
  }
  func.func @transform_7(%arg0: i32, %arg1: i32) -> (i32, i32) {
    %c0_i32 = arith.constant 0 : i32
    %c0_i32_0 = arith.constant 0 : i32
    %c0_i32_1 = arith.constant 0 : i32
    return %c0_i32, %c0_i32_0 : i32, i32
  }
  func.func @transform_8(%arg0: i32, %arg1: i32) -> (i32, i32) {
    %c0_i32 = arith.constant 0 : i32
    %c0_i32_0 = arith.constant 0 : i32
    %c0_i32_1 = arith.constant 0 : i32
    return %c0_i32, %c0_i32_0 : i32, i32
  }
  func.func @transform_9(%arg0: i32, %arg1: i32) -> (i32, i32) {
    %c0_i32 = arith.constant 0 : i32
    %c0_i32_0 = arith.constant 0 : i32
    %c0_i32_1 = arith.constant 0 : i32
    return %c0_i32, %c0_i32_0 : i32, i32
  }
  func.func @transform_10(%arg0: i32, %arg1: i32) -> (i32, i32) {
    %c0_i32 = arith.constant 0 : i32
    %c0_i32_0 = arith.constant 0 : i32
    %c0_i32_1 = arith.constant 0 : i32
    return %c0_i32, %c0_i32_0 : i32, i32
  }
  func.func @transform_11(%arg0: i32, %arg1: i32) -> (i32, i32, i32) {
    %c0_i32 = arith.constant 0 : i32
    %c0_i32_0 = arith.constant 0 : i32
    %c0_i32_1 = arith.constant 0 : i32
    return %arg0, %c0_i32, %c0_i32_0 : i32, i32, i32
  }
}

</mosaic_0001>

<llo_original>
// kernel: tpu_custom_call.1
$region0: #{tpu_custom_call.1}
  #allocation0 [shape = 'u32[]', space=smem, size = 0x4, offset = 0x4, fixed_abs, tag = 'smem constant byte address 0x4 - core index']
  #allocation1 [shape = 'u32[144,128]{1,0:T(1,128)}', space=vmem, size = 0x12000, scoped, tag = 'internal scratch']
  #allocation2 [shape = 'f32[1,64]{1,0:T(1,128)}', space=vmem, size = 0x200, scoped, tag = 'scratch operand']
  %s0 = inlined_call_operand.vmem [shape: f32[2,3,16], index: 0, kind: input, shape index: {}]
  %s1 = inlined_call_operand.vmem [shape: f32[3,64], index: 1, kind: input, shape index: {}]
  %s2 = inlined_call_operand.vmem [shape: f32[1,64], index: 2, kind: input, shape index: {}]
  %s3 = inlined_call_operand.vmem [shape: bf16[64,64], index: 3, kind: input, shape index: {}]
  %s4 = inlined_call_operand.vmem [shape: f32[1,64], index: 4, kind: input, shape index: {}]
  %s5 = inlined_call_operand.vmem [shape: bf16[64,64], index: 5, kind: input, shape index: {}]
  %s6 = inlined_call_operand.vmem [shape: f32[1,64], index: 6, kind: input, shape index: {}]
  %s7 = inlined_call_operand.vmem [shape: bf16[64,128], index: 7, kind: input, shape index: {}]
  %s8 = inlined_call_operand.vmem [shape: f32[1,128], index: 8, kind: input, shape index: {}]
  %s9 = inlined_call_operand.vmem [shape: bf16[128,64], index: 9, kind: input, shape index: {}]
  %s10 = inlined_call_operand.vmem [shape: f32[1,64], index: 10, kind: input, shape index: {}]
  %s11 = inlined_call_operand.hbm [shape: f32[2,1,64], index: 11, kind: output, shape index: {}]
  %s12 = sld [smem:[#allocation0]]
  $region85: #{tpu_custom_call.1} parent=0
    _
  %s14 = ssub.s32 1, %s12
  %s15 = scalar_select 0, %s14, %s12
  $region1: #{tpu_custom_call.1} parent=0
    #allocation3 [shape = 'u8[1024]{0}', space=vmem, size = 0x400, scoped, tag = 'output window, operand 0']
    #allocation4 [shape = 's32[2]{0}', space=sflag, size = 0x8, scoped, tag = 'scoped memory for tpu_custom_call.1']
    %16 = vsyncpa [#allocation4], 0
    %s17 = scalar_lea.sflag [#allocation4], 1
    %18 = vsyncpa %s17, 0
    loop: start=0, step=1, limit=4
    $region2: #{tpu_custom_call.1} parent=1 // loop_pre_header
      _
    $region3: #{tpu_custom_call.1} parent=1 // loop_header
      %s20 = sphi 0, %s24
      %p21 = scmp.ge.s32.totalorder %s20, 4
      %s27 = sphi 0, %s39
      %s28 = sphi 0, %s35
      %s29 = sphi 0, %s27
      %s30 = sphi 0, %s28
      %s31 = sphi 0, %s29
      %s32 = sphi 0, %s30
      %s44 = sphi 0, %s46
      %s47 = sphi 0, %s44
      %s48 = sphi 0, %s47
      %s64 = sphi 0, %s48
      %s68 = sphi 0, %s68
      %s70 = sphi 0, %s68
      %s71 = sphi 0, %s70
      %s85 = sphi 0, %s71
      %s89 = sphi 0, %s89
      %s91 = sphi 0, %s89
      %s92 = sphi 0, %s91
      %s106 = sphi 0, %s92
      %s110 = sphi 0, %s110
      %s112 = sphi 0, %s110
      %s113 = sphi 0, %s112
      %s127 = sphi 0, %s113
      %s131 = sphi 0, %s131
      %s133 = sphi 0, %s131
      %s134 = sphi 0, %s133
      %s148 = sphi 0, %s134
      %s152 = sphi 0, %s152
      %s154 = sphi 0, %s152
      %s155 = sphi 0, %s154
      %s169 = sphi 0, %s155
      %s173 = sphi 0, %s173
      %s175 = sphi 0, %s173
      %s176 = sphi 0, %s175
      %s190 = sphi 0, %s176
      %s194 = sphi 0, %s194
      %s196 = sphi 0, %s194
      %s197 = sphi 0, %s196
      %s211 = sphi 0, %s197
      %s215 = sphi 0, %s215
      %s217 = sphi 0, %s215
      %s218 = sphi 0, %s217
      %s232 = sphi 0, %s218
      %s236 = sphi 0, %s236
      %s238 = sphi 0, %s236
      %s239 = sphi 0, %s238
      %s253 = sphi 0, %s239
      %s257 = sphi 0, %s257
      %s259 = sphi 0, %s257
      %s260 = sphi 0, %s259
      %s274 = sphi 0, %s260
      %s280 = sphi 0, %s282
      %s283 = sphi 0, %s280
      %s284 = sphi 0, %s283
      %s300 = sphi 0, %s284
    $region4: #{tpu_custom_call.1} parent=1 // loop_header_branch
      %23 = sbr.rel (%p21) target = $region8
    $region5: #{tpu_custom_call.1} parent=1 // loop_body
      %s25 = ssub.s32 %s20, 1
      %s26 = ssub.s32 %s20, 2
      %s33 = sadd.s32 1, %s28
      %p34 = scmp.ge.s32.totalorder %s33, 1
      %s35 = scalar_select %p34, 0, %s33
      %s36 = sadd.s32 1, %s27
      %s37 = scalar_select %p34, %s36, %s27
      %p38 = scmp.ge.s32.totalorder %s37, 2
      %s39 = scalar_select %p38, 0, %s37
      %s40 = ssub.s32 %s27, %s39
      %s41 = ssub.s32 %s28, %s35
      %s42 = sor.u32 %s40, %s41
      %p43 = scmp.eq.s32.totalorder %s42, 0
      %s45 = sadd.s32 %s44, 1
      %s46 = scalar_select %p43, %s44, %s45
      %p49 = pneg %p43
      %p50 = scmp.eq.s32.totalorder %s20, 1
      %p51 = por %p49, %p50
      %p52 = scmp.ne.s32.totalorder %s44, %s47
      %p53 = scmp.eq.s32.totalorder %s20, 0
      %p54 = por %p52, %p53
      %p55 = scmp.ne.s32.totalorder %s44, %s47
      %p56 = scmp.eq.s32.totalorder %s25, 1
      %p57 = por %p55, %p56
      %p58 = scmp.ne.s32.totalorder %s47, %s48
      %p59 = scmp.eq.s32.totalorder %s25, 0
      %p60 = por %p58, %p59
      %p61 = scmp.ne.s32.totalorder %s47, %s48
      %p62 = scmp.eq.s32.totalorder %s26, 1
      %p63 = por %p61, %p62
      %p65 = scmp.ne.s32.totalorder %s48, %s64
      %p66 = scmp.eq.s32.totalorder %s26, 0
      %p67 = por %p65, %p66
      %s69 = sadd.s32 %s68, 1
      %p72 = scmp.eq.s32.totalorder %s20, 1
      %p73 = scmp.ne.s32.totalorder %s68, %s70
      %p74 = scmp.eq.s32.totalorder %s20, 0
      %p75 = por %p73, %p74
      %p76 = scmp.ne.s32.totalorder %s68, %s70
      %p77 = scmp.eq.s32.totalorder %s25, 1
      %p78 = por %p76, %p77
      %p79 = scmp.ne.s32.totalorder %s70, %s71
      %p80 = scmp.eq.s32.totalorder %s25, 0
      %p81 = por %p79, %p80
      %p82 = scmp.ne.s32.totalorder %s70, %s71
      %p83 = scmp.eq.s32.totalorder %s26, 1
      %p84 = por %p82, %p83
      %p86 = scmp.ne.s32.totalorder %s71, %s85
      %p87 = scmp.eq.s32.totalorder %s26, 0
      %p88 = por %p86, %p87
      %s90 = sadd.s32 %s89, 1
      %p93 = scmp.eq.s32.totalorder %s20, 1
      %p94 = scmp.ne.s32.totalorder %s89, %s91
      %p95 = scmp.eq.s32.totalorder %s20, 0
      %p96 = por %p94, %p95
      %p97 = scmp.ne.s32.totalorder %s89, %s91
      %p98 = scmp.eq.s32.totalorder %s25, 1
      %p99 = por %p97, %p98
      %p100 = scmp.ne.s32.totalorder %s91, %s92
      %p101 = scmp.eq.s32.totalorder %s25, 0
      %p102 = por %p100, %p101
      %p103 = scmp.ne.s32.totalorder %s91, %s92
      %p104 = scmp.eq.s32.totalorder %s26, 1
      %p105 = por %p103, %p104
      %p107 = scmp.ne.s32.totalorder %s92, %s106
      %p108 = scmp.eq.s32.totalorder %s26, 0
      %p109 = por %p107, %p108
      %s111 = sadd.s32 %s110, 1
      %p114 = scmp.eq.s32.totalorder %s20, 1
      %p115 = scmp.ne.s32.totalorder %s110, %s112
      %p116 = scmp.eq.s32.totalorder %s20, 0
      %p117 = por %p115, %p116
      %p118 = scmp.ne.s32.totalorder %s110, %s112
      %p119 = scmp.eq.s32.totalorder %s25, 1
      %p120 = por %p118, %p119
      %p121 = scmp.ne.s32.totalorder %s112, %s113
      %p122 = scmp.eq.s32.totalorder %s25, 0
      %p123 = por %p121, %p122
      %p124 = scmp.ne.s32.totalorder %s112, %s113
      %p125 = scmp.eq.s32.totalorder %s26, 1
      %p126 = por %p124, %p125
      %p128 = scmp.ne.s32.totalorder %s113, %s127
      %p129 = scmp.eq.s32.totalorder %s26, 0
      %p130 = por %p128, %p129
      %s132 = sadd.s32 %s131, 1
      %p135 = scmp.eq.s32.totalorder %s20, 1
      %p136 = scmp.ne.s32.totalorder %s131, %s133
      %p137 = scmp.eq.s32.totalorder %s20, 0
      %p138 = por %p136, %p137
      %p139 = scmp.ne.s32.totalorder %s131, %s133
      %p140 = scmp.eq.s32.totalorder %s25, 1
      %p141 = por %p139, %p140
      %p142 = scmp.ne.s32.totalorder %s133, %s134
      %p143 = scmp.eq.s32.totalorder %s25, 0
      %p144 = por %p142, %p143
      %p145 = scmp.ne.s32.totalorder %s133, %s134
      %p146 = scmp.eq.s32.totalorder %s26, 1
      %p147 = por %p145, %p146
      %p149 = scmp.ne.s32.totalorder %s134, %s148
      %p150 = scmp.eq.s32.totalorder %s26, 0
      %p151 = por %p149, %p150
      %s153 = sadd.s32 %s152, 1
      %p156 = scmp.eq.s32.totalorder %s20, 1
      %p157 = scmp.ne.s32.totalorder %s152, %s154
      %p158 = scmp.eq.s32.totalorder %s20, 0
      %p159 = por %p157, %p158
      %p160 = scmp.ne.s32.totalorder %s152, %s154
      %p161 = scmp.eq.s32.totalorder %s25, 1
      %p162 = por %p160, %p161
      %p163 = scmp.ne.s32.totalorder %s154, %s155
      %p164 = scmp.eq.s32.totalorder %s25, 0
      %p165 = por %p163, %p164
      %p166 = scmp.ne.s32.totalorder %s154, %s155
      %p167 = scmp.eq.s32.totalorder %s26, 1
      %p168 = por %p166, %p167
      %p170 = scmp.ne.s32.totalorder %s155, %s169
      %p171 = scmp.eq.s32.totalorder %s26, 0
      %p172 = por %p170, %p171
      %s174 = sadd.s32 %s173, 1
      %p177 = scmp.eq.s32.totalorder %s20, 1
      %p178 = scmp.ne.s32.totalorder %s173, %s175
      %p179 = scmp.eq.s32.totalorder %s20, 0
      %p180 = por %p178, %p179
      %p181 = scmp.ne.s32.totalorder %s173, %s175
      %p182 = scmp.eq.s32.totalorder %s25, 1
      %p183 = por %p181, %p182
      %p184 = scmp.ne.s32.totalorder %s175, %s176
      %p185 = scmp.eq.s32.totalorder %s25, 0
      %p186 = por %p184, %p185
      %p187 = scmp.ne.s32.totalorder %s175, %s176
      %p188 = scmp.eq.s32.totalorder %s26, 1
      %p189 = por %p187, %p188
      %p191 = scmp.ne.s32.totalorder %s176, %s190
      %p192 = scmp.eq.s32.totalorder %s26, 0
      %p193 = por %p191, %p192
      %s195 = sadd.s32 %s194, 1
      %p198 = scmp.eq.s32.totalorder %s20, 1
      %p199 = scmp.ne.s32.totalorder %s194, %s196
      %p200 = scmp.eq.s32.totalorder %s20, 0
      %p201 = por %p199, %p200
      %p202 = scmp.ne.s32.totalorder %s194, %s196
      %p203 = scmp.eq.s32.totalorder %s25, 1
      %p204 = por %p202, %p203
      %p205 = scmp.ne.s32.totalorder %s196, %s197
      %p206 = scmp.eq.s32.totalorder %s25, 0
      %p207 = por %p205, %p206
      %p208 = scmp.ne.s32.totalorder %s196, %s197
      %p209 = scmp.eq.s32.totalorder %s26, 1
      %p210 = por %p208, %p209
      %p212 = scmp.ne.s32.totalorder %s197, %s211
      %p213 = scmp.eq.s32.totalorder %s26, 0
      %p214 = por %p212, %p213
      %s216 = sadd.s32 %s215, 1
      %p219 = scmp.eq.s32.totalorder %s20, 1
      %p220 = scmp.ne.s32.totalorder %s215, %s217
      %p221 = scmp.eq.s32.totalorder %s20, 0
      %p222 = por %p220, %p221
      %p223 = scmp.ne.s32.totalorder %s215, %s217
      %p224 = scmp.eq.s32.totalorder %s25, 1
      %p225 = por %p223, %p224
      %p226 = scmp.ne.s32.totalorder %s217, %s218
      %p227 = scmp.eq.s32.totalorder %s25, 0
      %p228 = por %p226, %p227
      %p229 = scmp.ne.s32.totalorder %s217, %s218
      %p230 = scmp.eq.s32.totalorder %s26, 1
      %p231 = por %p229, %p230
      %p233 = scmp.ne.s32.totalorder %s218, %s232
      %p234 = scmp.eq.s32.totalorder %s26, 0
      %p235 = por %p233, %p234
      %s237 = sadd.s32 %s236, 1
      %p240 = scmp.eq.s32.totalorder %s20, 1
      %p241 = scmp.ne.s32.totalorder %s236, %s238
      %p242 = scmp.eq.s32.totalorder %s20, 0
      %p243 = por %p241, %p242
      %p244 = scmp.ne.s32.totalorder %s236, %s238
      %p245 = scmp.eq.s32.totalorder %s25, 1
      %p246 = por %p244, %p245
      %p247 = scmp.ne.s32.totalorder %s238, %s239
      %p248 = scmp.eq.s32.totalorder %s25, 0
      %p249 = por %p247, %p248
      %p250 = scmp.ne.s32.totalorder %s238, %s239
      %p251 = scmp.eq.s32.totalorder %s26, 1
      %p252 = por %p250, %p251
      %p254 = scmp.ne.s32.totalorder %s239, %s253
      %p255 = scmp.eq.s32.totalorder %s26, 0
      %p256 = por %p254, %p255
      %s258 = sadd.s32 %s257, 1
      %p261 = scmp.eq.s32.totalorder %s20, 1
      %p262 = scmp.ne.s32.totalorder %s257, %s259
      %p263 = scmp.eq.s32.totalorder %s20, 0
      %p264 = por %p262, %p263
      %p265 = scmp.ne.s32.totalorder %s257, %s259
      %p266 = scmp.eq.s32.totalorder %s25, 1
      %p267 = por %p265, %p266
      %p268 = scmp.ne.s32.totalorder %s259, %s260
      %p269 = scmp.eq.s32.totalorder %s25, 0
      %p270 = por %p268, %p269
      %p271 = scmp.ne.s32.totalorder %s259, %s260
      %p272 = scmp.eq.s32.totalorder %s26, 1
      %p273 = por %p271, %p272
      %p275 = scmp.ne.s32.totalorder %s260, %s274
      %p276 = scmp.eq.s32.totalorder %s26, 0
      %p277 = por %p275, %p276
      %s278 = ssub.s32 %s27, %s39
      %p279 = scmp.eq.s32.totalorder %s278, 0
      %s281 = sadd.s32 %s280, 1
      %s282 = scalar_select %p279, %s280, %s281
      %p285 = pneg %p279
      %p286 = scmp.eq.s32.totalorder %s20, 1
      %p287 = por %p285, %p286
      %p288 = scmp.ne.s32.totalorder %s280, %s283
      %p289 = scmp.eq.s32.totalorder %s20, 0
      %p290 = por %p288, %p289
      %p291 = scmp.ne.s32.totalorder %s280, %s283
      %p292 = scmp.eq.s32.totalorder %s25, 1
      %p293 = por %p291, %p292
      %p294 = scmp.ne.s32.totalorder %s283, %s284
      %p295 = scmp.eq.s32.totalorder %s25, 0
      %p296 = por %p294, %p295
      %p297 = scmp.ne.s32.totalorder %s283, %s284
      %p298 = scmp.eq.s32.totalorder %s26, 1
      %p299 = por %p297, %p298
      %p301 = scmp.ne.s32.totalorder %s284, %s300
      %p302 = scmp.eq.s32.totalorder %s26, 0
      %p303 = por %p301, %p302
      %p304 = scmp.le.s32.totalorder 1, %s20
      %p305 = scmp.lt.s32.totalorder %s20, 3
      %p306 = pnand %p304, %p305
      %p307 = pneg %p306
      // Predicated region
      $region9: #{tpu_custom_call.1} parent=5 // pred_check
        _
      $region10: #{tpu_custom_call.1} parent=5 // pred_check_branch
        %309 = sbr.rel (%p306) target = $region12
      $region11: #{tpu_custom_call.1} parent=5 // pred_region
        %s310 = ssub.s32 %s20, 1
        // Predicated region
        $region13: #{tpu_custom_call.1} parent=11 // pred_check
          %p311 = pneg %p81
        $region14: #{tpu_custom_call.1} parent=11 // pred_check_branch
          %313 = sbr.rel (%p311) target = $region16
        $region15: #{tpu_custom_call.1} parent=11 // pred_region
          _
        $region16: #{tpu_custom_call.1} parent=11 // pred_fallthru
          _
        // Predicated region
        $region17: #{tpu_custom_call.1} parent=11 // pred_check
          %p314 = pneg %p102
        $region18: #{tpu_custom_call.1} parent=11 // pred_check_branch
          %316 = sbr.rel (%p314) target = $region20
        $region19: #{tpu_custom_call.1} parent=11 // pred_region
          _
        $region20: #{tpu_custom_call.1} parent=11 // pred_fallthru
          _
        // Predicated region
        $region21: #{tpu_custom_call.1} parent=11 // pred_check
          %p317 = pneg %p123
        $region22: #{tpu_custom_call.1} parent=11 // pred_check_branch
          %319 = sbr.rel (%p317) target = $region24
        $region23: #{tpu_custom_call.1} parent=11 // pred_region
          _
        $region24: #{tpu_custom_call.1} parent=11 // pred_fallthru
          _
        // Predicated region
        $region25: #{tpu_custom_call.1} parent=11 // pred_check
          %p320 = pneg %p144
        $region26: #{tpu_custom_call.1} parent=11 // pred_check_branch
          %322 = sbr.rel (%p320) target = $region28
        $region27: #{tpu_custom_call.1} parent=11 // pred_region
          _
        $region28: #{tpu_custom_call.1} parent=11 // pred_fallthru
          _
        // Predicated region
        $region29: #{tpu_custom_call.1} parent=11 // pred_check
          %p323 = pneg %p165
        $region30: #{tpu_custom_call.1} parent=11 // pred_check_branch
          %325 = sbr.rel (%p323) target = $region32
        $region31: #{tpu_custom_call.1} parent=11 // pred_region
          _
        $region32: #{tpu_custom_call.1} parent=11 // pred_fallthru
          _
        // Predicated region
        $region33: #{tpu_custom_call.1} parent=11 // pred_check
          %p326 = pneg %p186
        $region34: #{tpu_custom_call.1} parent=11 // pred_check_branch
          %328 = sbr.rel (%p326) target = $region36
        $region35: #{tpu_custom_call.1} parent=11 // pred_region
          _
        $region36: #{tpu_custom_call.1} parent=11 // pred_fallthru
          _
        // Predicated region
        $region37: #{tpu_custom_call.1} parent=11 // pred_check
          %p329 = pneg %p207
        $region38: #{tpu_custom_call.1} parent=11 // pred_check_branch
          %331 = sbr.rel (%p329) target = $region40
        $region39: #{tpu_custom_call.1} parent=11 // pred_region
          _
        $region40: #{tpu_custom_call.1} parent=11 // pred_fallthru
          _
        // Predicated region
        $region41: #{tpu_custom_call.1} parent=11 // pred_check
          %p332 = pneg %p228
        $region42: #{tpu_custom_call.1} parent=11 // pred_check_branch
          %334 = sbr.rel (%p332) target = $region44
        $region43: #{tpu_custom_call.1} parent=11 // pred_region
          _
        $region44: #{tpu_custom_call.1} parent=11 // pred_fallthru
          _
        // Predicated region
        $region45: #{tpu_custom_call.1} parent=11 // pred_check
          %p335 = pneg %p249
        $region46: #{tpu_custom_call.1} parent=11 // pred_check_branch
          %337 = sbr.rel (%p335) target = $region48
        $region47: #{tpu_custom_call.1} parent=11 // pred_region
          _
        $region48: #{tpu_custom_call.1} parent=11 // pred_fallthru
          _
        // Predicated region
        $region49: #{tpu_custom_call.1} parent=11 // pred_check
          %p338 = pneg %p270
        $region50: #{tpu_custom_call.1} parent=11 // pred_check_branch
          %340 = sbr.rel (%p338) target = $region52
        $region51: #{tpu_custom_call.1} parent=11 // pred_region
          _
        $region52: #{tpu_custom_call.1} parent=11 // pred_fallthru
          _
      $region12: #{tpu_custom_call.1} parent=5 // pred_fallthru
        _
      %p341 = scmp.lt.s32.totalorder %s20, 2
      // Predicated region
      $region53: #{tpu_custom_call.1} parent=5 // pred_check
        %p342 = pneg %p341
      $region54: #{tpu_custom_call.1} parent=5 // pred_check_branch
        %344 = sbr.rel (%p342) target = $region56
      $region55: #{tpu_custom_call.1} parent=5 // pred_region
        // Predicated region
        $region57: #{tpu_custom_call.1} parent=55 // pred_check
          %p345 = pneg %p54
        $region58: #{tpu_custom_call.1} parent=55 // pred_check_branch
          %347 = sbr.rel (%p345) target = $region60
        $region59: #{tpu_custom_call.1} parent=55 // pred_region
          %p348 = scmp.lt.s32.totalorder %s27, 1
          %s349 = scalar_select %p348, %s27, 1
          %p350 = scmp.lt.s32.totalorder %s28, 0
          %s351 = scalar_select %p350, %s28, 0
          %s352 = sadd.s32 %s351, %s349
          %s353 = smul.addr %s352, 4
          %s354 = scalar_lea.vmem %s0, %s353
        $region60: #{tpu_custom_call.1} parent=55 // pred_fallthru
          _
      $region56: #{tpu_custom_call.1} parent=5 // pred_fallthru
        _
      %p355 = scmp.le.s32.totalorder 1, %s20
      %p356 = scmp.lt.s32.totalorder %s20, 3
      %p357 = pnand %p355, %p356
      %p358 = pneg %p357
      // Predicated region
      $region61: #{tpu_custom_call.1} parent=5 // pred_check
        _
      $region62: #{tpu_custom_call.1} parent=5 // pred_check_branch
        %360 = sbr.rel (%p357) target = $region64
      $region63: #{tpu_custom_call.1} parent=5 // pred_region
        %s361 = ssub.s32 %s20, 1
        %p362 = scmp.lt.s32.totalorder %s29, 1
        %s363 = scalar_select %p362, %s29, 1
        %p364 = scmp.lt.s32.totalorder %s30, 0
        %s365 = scalar_select %p364, %s30, 0
        %s366 = sadd.s32 %s365, %s363
        %s367 = smul.addr %s366, 4
        %s368 = scalar_lea.vmem %s0, %s367
        %p369 = pneg %p60
        %p370 = pneg %p57
        %p371 = pneg %p81
        %p372 = pneg %p78
        %p373 = pneg %p102
        %p374 = pneg %p99
        %p375 = pneg %p123
        %p376 = pneg %p120
        %p377 = pneg %p144
        %p378 = pneg %p141
        %p379 = pneg %p165
        %p380 = pneg %p162
        %p381 = pneg %p186
        %p382 = pneg %p183
        %p383 = pneg %p207
        %p384 = pneg %p204
        %p385 = pneg %p228
        %p386 = pneg %p225
        %p387 = pneg %p249
        %p388 = pneg %p246
        %p389 = pneg %p270
        %p390 = pneg %p267
        %p391 = pneg %p296
        %p392 = pneg %p293
        %s393 = sand.u32 %s283, 1
        %s394 = scalar_lea.sflag [#allocation4], %s393
        %s395 = sand.u32 %s283, 1
        %s396 = scalar_lea.vmem [#allocation3], %s395
        %p397 = scmp.lt.s32.totalorder %s29, 1
        %s398 = scalar_select %p397, %s29, 1
        %p399 = scmp.lt.s32.totalorder %s30, 0
        %s400 = scalar_select %p399, %s30, 0
        %s401 = sadd.s32 %s400, %s398
        %s402 = smul.addr %s401, 4
        %s403 = scalar_lea.vmem %s0, %s402
        %p405 = scmp.eq.s32.totalorder %s30, 0
        // Predicated region
        $region65: #{tpu_custom_call.1} parent=63 // pred_check
          %p406 = pneg %p405
        $region66: #{tpu_custom_call.1} parent=63 // pred_check_branch
          %408 = sbr.rel (%p406) target = $region68
        $region67: #{tpu_custom_call.1} parent=63 // pred_region
          %vm409 = vcmask 516096
          %410 = vst.msk [vmem:[#allocation2] sm:$0x1] %vm409, -inf
        $region68: #{tpu_custom_call.1} parent=63 // pred_fallthru
          _
        %v411 = vld [vmem:[%s403] sm:$0x7]
        %v412 = vld [vmem:[%s1] sm:$0x7]
        %v413 = vld [vmem:[%s2] sm:$0x1]
        %v415 = vlaneseq
        %v416 = vshrl.u32 %v415, 7
        %v417 = vsub.s32 0, %v416
        %v418 = vrot.slane %v413, %v417
        %420 = vxpose.xlu0.b32.start [1/16] %v411, 128
        %421 = vxpose.xlu0.b32.cont [2/16] 0.0, 128
        %422 = vxpose.xlu0.b32.cont [3/16] 0.0, 128
        %423 = vxpose.xlu0.b32.cont [4/16] 0.0, 128
        %424 = vxpose.xlu0.b32.cont [5/16] 0.0, 128
        %425 = vxpose.xlu0.b32.cont [6/16] 0.0, 128
        %426 = vxpose.xlu0.b32.cont [7/16] 0.0, 128
        %427 = vxpose.xlu0.b32.cont [8/16] 0.0, 128
        %428 = vxpose.xlu0.b32.cont [9/16] 0.0, 128
        %429 = vxpose.xlu0.b32.cont [10/16] 0.0, 128
        %430 = vxpose.xlu0.b32.cont [11/16] 0.0, 128
        %431 = vxpose.xlu0.b32.cont [12/16] 0.0, 128
        %432 = vxpose.xlu0.b32.cont [13/16] 0.0, 128
        %433 = vxpose.xlu0.b32.cont [14/16] 0.0, 128
        %434 = vxpose.xlu0.b32.cont [15/16] 0.0, 128
        %435 = vxpose.xlu0.b32.end [16/16] 0.0, 128
        %v436 = vpop.trf.xlu0
        %v437 = vpop.trf.xlu0
        %v438 = vpop.trf.xlu0
        %v439 = vpop.trf.xlu0
        %v440 = vpop.trf.xlu0
        %v441 = vpop.trf.xlu0
        %v442 = vpop.trf.xlu0
        %v443 = vpop.trf.xlu0
        %v444 = vpop.trf.xlu0
        %v445 = vpop.trf.xlu0
        %v446 = vpop.trf.xlu0
        %v447 = vpop.trf.xlu0
        %v448 = vpop.trf.xlu0
        %v449 = vpop.trf.xlu0
        %v450 = vpop.trf.xlu0
        %v451 = vpop.trf.xlu0
        %vm452 = vcmask 23552
        %v454 = vsel %vm452, %v436, 0
        %v457 = vsel %vm452, %v437, 0
        %vm459 = vcmask 1042432
        %v461 = vsel %vm459, %v412, 0
        %463 = vmatprep.subr.mxu0 0.0
        %464 = vmatpush1.msra.mxu0 %v461
        %465 = vmatprep.subr.mxu0 0.0
        %466 = vmatpush1.msra.mxu0 0.0
        %467 = vmatprep.subr.mxu0 0.0
        %468 = vmatpush1.msra.mxu0 0.0
        %469 = vmatprep.subr.mxu0 0.0
        %470 = vmatpush1.msra.mxu0 0.0
        %471 = vmatprep.subr.mxu0 0.0
        %472 = vmatpush1.msra.mxu0 0.0
        %473 = vmatprep.subr.mxu0 0.0
        %474 = vmatpush1.msra.mxu0 0.0
        %475 = vmatprep.subr.mxu0 0.0
        %476 = vmatpush1.msra.mxu0 0.0
        %477 = vmatprep.subr.mxu0 0.0
        %478 = vmatpush1.msra.mxu0 0.0
        %479 = vmatprep.subr.mxu0 0.0
        %480 = vmatpush1.msra.mxu0 0.0
        %481 = vmatprep.subr.mxu0 0.0
        %482 = vmatpush1.msra.mxu0 0.0
        %483 = vmatprep.subr.mxu0 0.0
        %484 = vmatpush1.msra.mxu0 0.0
        %485 = vmatprep.subr.mxu0 0.0
        %486 = vmatpush1.msra.mxu0 0.0
        %487 = vmatprep.subr.mxu0 0.0
        %488 = vmatpush1.msra.mxu0 0.0
        %489 = vmatprep.subr.mxu0 0.0
        %490 = vmatpush1.msra.mxu0 0.0
        %491 = vmatprep.subr.mxu0 0.0
        %492 = vmatpush1.msra.mxu0 0.0
        %493 = vmatprep.subr.mxu0 0.0
        %494 = vmatpush1.msra.mxu0 0.0
        %495 = vmatprep.subr.mxu0 0.0
        %496 = vmatpush1.msra.mxu0 0.0
        %497 = vmatprep.subr.mxu0 0.0
        %498 = vmatpush1.msra.mxu0 0.0
        %499 = vmatprep.subr.mxu0 0.0
        %500 = vmatpush1.msra.mxu0 0.0
        %501 = vmatprep.subr.mxu0 0.0
        %502 = vmatpush1.msra.mxu0 0.0
        %503 = vmatprep.subr.mxu0 0.0
        %504 = vmatpush1.msra.mxu0 0.0
        %505 = vmatprep.subr.mxu0 0.0
        %506 = vmatpush1.msra.mxu0 0.0
        %507 = vmatprep.subr.mxu0 0.0
        %508 = vmatpush1.msra.mxu0 0.0
        %509 = vmatprep.subr.mxu0 0.0
        %510 = vmatpush1.msra.mxu0 0.0
        %511 = vmatprep.subr.mxu0 0.0
        %512 = vmatpush1.msra.mxu0 0.0
        %513 = vmatprep.subr.mxu0 0.0
        %514 = vmatpush1.msra.mxu0 0.0
        %515 = vmatprep.subr.mxu0 0.0
        %516 = vmatpush1.msra.mxu0 0.0
        %517 = vmatprep.subr.mxu0 0.0
        %518 = vmatpush1.msra.mxu0 0.0
        %519 = vmatprep.subr.mxu0 0.0
        %520 = vmatpush1.msra.mxu0 0.0
        %521 = vmatprep.subr.mxu0 0.0
        %522 = vmatpush1.msra.mxu0 0.0
        %523 = vmatprep.subr.mxu0 0.0
        %524 = vmatpush1.msra.mxu0 0.0
        %525 = vmatprep.subr.mxu0 0.0
        %526 = vmatpush1.msra.mxu0 0.0
        %527 = vmatprep.mubr.f32.mxu0 0.0
        %528 = vmatmul.mubr.f32.gmra.mrb[0].mxu0 %v454
        %v529 = vpop.f32.mrb[0].mxu0
        %v530 = vadd.f32 %v418, %v529
        %v531 = vpop.f32.mrb[0].mxu0
        %532 = vmatprep.mubr.f32.mxu0 0.0
        %533 = vmatmul.mubr.f32.gmra.mrb[0].mxu0 %v457
        %v534 = vpop.f32.mrb[0].mxu0
        %v535 = vadd.f32 %v418, %v534
        %v536 = vpop.f32.mrb[0].mxu0
        %537 = vdwg.mxu0
        %v538 = vmax.f32 %v530, 0.0
        %v539 = vmax.f32 %v535, 0.0
        %v540 = vpack.c.bf16 %v539, %v538
        %v541 = vld [vmem:[%s3] sm:$0xf]
        %v542 = vld [vmem:[%s3 + $0x4] sm:$0xf]
        %v543 = vld [vmem:[%s3 + $0x8] sm:$0xf]
        %v544 = vld [vmem:[%s3 + $0xc] sm:$0xf]
        %v545 = vld [vmem:[%s3 + $0x10] sm:$0xf]
        %v546 = vld [vmem:[%s3 + $0x14] sm:$0xf]
        %v547 = vld [vmem:[%s3 + $0x18] sm:$0xf]
        %v548 = vld [vmem:[%s3 + $0x1c] sm:$0xf]
        %v549 = vld [vmem:[%s4] sm:$0x1]
        %v551 = vlaneseq
        %v552 = vshrl.u32 %v551, 7
        %v553 = vsub.s32 0, %v552
        %v554 = vrot.slane %v549, %v553
        %v564 = vunpack.c.l.b16 %v541
        %v565 = vunpack.c.l.b16 %v542
        %v566 = vunpack.c.l.b16 %v543
        %v567 = vunpack.c.l.b16 %v544
        %v568 = vunpack.c.l.b16 %v545
        %v569 = vunpack.c.l.b16 %v546
        %v570 = vunpack.c.l.b16 %v547
        %v571 = vunpack.c.l.b16 %v548
        %v572 = vpack.c.b16 %v565, %v564
        %v573 = vpack.c.b16 %v567, %v566
        %v574 = vpack.c.b16 %v569, %v568
        %v575 = vpack.c.b16 %v571, %v570
        %vm580 = vcmask 523264
        %v582 = vsel %vm580, %v540, 0
        %584 = vmatprep.subr.bf16.mxu0 0
        %585 = vmatpush1.bf16.msra.mxu0 %v572
        %586 = vmatprep.subr.bf16.mxu0 0
        %587 = vmatpush1.bf16.msra.mxu0 %v573
        %588 = vmatprep.subr.bf16.mxu0 0
        %589 = vmatpush1.bf16.msra.mxu0 %v574
        %590 = vmatprep.subr.bf16.mxu0 0
        %591 = vmatpush1.bf16.msra.mxu0 %v575
        %592 = vmatprep.subr.bf16.mxu0 0
        %593 = vmatpush1.bf16.msra.mxu0 0
        %594 = vmatprep.subr.bf16.mxu0 0
        %595 = vmatpush1.bf16.msra.mxu0 0
        %596 = vmatprep.subr.bf16.mxu0 0
        %597 = vmatpush1.bf16.msra.mxu0 0
        %598 = vmatprep.subr.bf16.mxu0 0
        %599 = vmatpush1.bf16.msra.mxu0 0
        %600 = vmatprep.subr.bf16.mxu0 0
        %601 = vmatpush1.bf16.msra.mxu0 0
        %602 = vmatprep.subr.bf16.mxu0 0
        %603 = vmatpush1.bf16.msra.mxu0 0
        %604 = vmatprep.subr.bf16.mxu0 0
        %605 = vmatpush1.bf16.msra.mxu0 0
        %606 = vmatprep.subr.bf16.mxu0 0
        %607 = vmatpush1.bf16.msra.mxu0 0
        %608 = vmatprep.subr.bf16.mxu0 0
        %609 = vmatpush1.bf16.msra.mxu0 0
        %610 = vmatprep.subr.bf16.mxu0 0
        %611 = vmatpush1.bf16.msra.mxu0 0
        %612 = vmatprep.subr.bf16.mxu0 0
        %613 = vmatpush1.bf16.msra.mxu0 0
        %614 = vmatprep.subr.bf16.mxu0 0
        %615 = vmatpush1.bf16.msra.mxu0 0
        %616 = vmatprep.mubr.bf16.mxu0 0
        %617 = vmatmul.mubr.bf16.gmra.mrb[0].mxu0 %v582
        %v618 = vpop.f32.mrb[0].mxu0
        %v619 = vadd.f32 %v554, %v618
        %v620 = vpop.f32.mrb[0].mxu0
        %v621 = vpop.f32.mrb[0].mxu0
        %v622 = vadd.f32 %v554, %v621
        %v623 = vpop.f32.mrb[0].mxu0
        %624 = vdwg.mxu0
        %v625 = vmax.f32 %v619, 0.0
        %v626 = vmax.f32 %v622, 0.0
        %v627 = vpack.c.bf16 %v626, %v625
        %v628 = vld [vmem:[%s5] sm:$0xf]
        %v629 = vld [vmem:[%s5 + $0x4] sm:$0xf]
        %v630 = vld [vmem:[%s5 + $0x8] sm:$0xf]
        %v631 = vld [vmem:[%s5 + $0xc] sm:$0xf]
        %v632 = vld [vmem:[%s5 + $0x10] sm:$0xf]
        %v633 = vld [vmem:[%s5 + $0x14] sm:$0xf]
        %v634 = vld [vmem:[%s5 + $0x18] sm:$0xf]
        %v635 = vld [vmem:[%s5 + $0x1c] sm:$0xf]
        %v636 = vld [vmem:[%s6] sm:$0x1]
        %v638 = vlaneseq
        %v639 = vshrl.u32 %v638, 7
        %v640 = vsub.s32 0, %v639
        %v641 = vrot.slane %v636, %v640
        %v651 = vunpack.c.l.b16 %v628
        %v652 = vunpack.c.l.b16 %v629
        %v653 = vunpack.c.l.b16 %v630
        %v654 = vunpack.c.l.b16 %v631
        %v655 = vunpack.c.l.b16 %v632
        %v656 = vunpack.c.l.b16 %v633
        %v657 = vunpack.c.l.b16 %v634
        %v658 = vunpack.c.l.b16 %v635
        %v659 = vpack.c.b16 %v652, %v651
        %v660 = vpack.c.b16 %v654, %v653
        %v661 = vpack.c.b16 %v656, %v655
        %v662 = vpack.c.b16 %v658, %v657
        %v668 = vsel %vm580, %v627, 0
        %670 = vmatprep.subr.bf16.mxu0 0
        %671 = vmatpush1.bf16.msra.mxu0 %v659
        %672 = vmatprep.subr.bf16.mxu0 0
        %673 = vmatpush1.bf16.msra.mxu0 %v660
        %674 = vmatprep.subr.bf16.mxu0 0
        %675 = vmatpush1.bf16.msra.mxu0 %v661
        %676 = vmatprep.subr.bf16.mxu0 0
        %677 = vmatpush1.bf16.msra.mxu0 %v662
        %678 = vmatprep.subr.bf16.mxu0 0
        %679 = vmatpush1.bf16.msra.mxu0 0
        %680 = vmatprep.subr.bf16.mxu0 0
        %681 = vmatpush1.bf16.msra.mxu0 0
        %682 = vmatprep.subr.bf16.mxu0 0
        %683 = vmatpush1.bf16.msra.mxu0 0
        %684 = vmatprep.subr.bf16.mxu0 0
        %685 = vmatpush1.bf16.msra.mxu0 0
        %686 = vmatprep.subr.bf16.mxu0 0
        %687 = vmatpush1.bf16.msra.mxu0 0
        %688 = vmatprep.subr.bf16.mxu0 0
        %689 = vmatpush1.bf16.msra.mxu0 0
        %690 = vmatprep.subr.bf16.mxu0 0
        %691 = vmatpush1.bf16.msra.mxu0 0
        %692 = vmatprep.subr.bf16.mxu0 0
        %693 = vmatpush1.bf16.msra.mxu0 0
        %694 = vmatprep.subr.bf16.mxu0 0
        %695 = vmatpush1.bf16.msra.mxu0 0
        %696 = vmatprep.subr.bf16.mxu0 0
        %697 = vmatpush1.bf16.msra.mxu0 0
        %698 = vmatprep.subr.bf16.mxu0 0
        %699 = vmatpush1.bf16.msra.mxu0 0
        %700 = vmatprep.subr.bf16.mxu0 0
        %701 = vmatpush1.bf16.msra.mxu0 0
        %702 = vmatprep.mubr.bf16.mxu0 0
        %703 = vmatmul.mubr.bf16.gmra.mrb[0].mxu0 %v668
        %v704 = vpop.f32.mrb[0].mxu0
        %v705 = vadd.f32 %v641, %v704
        %v706 = vpop.f32.mrb[0].mxu0
        %v707 = vpop.f32.mrb[0].mxu0
        %v708 = vadd.f32 %v641, %v707
        %v709 = vpop.f32.mrb[0].mxu0
        %710 = vdwg.mxu0
        %v711 = vmax.f32 %v705, 0.0
        %v712 = vmax.f32 %v708, 0.0
        %v713 = vpack.c.bf16 %v712, %v711
        %v714 = vld [vmem:[%s7] sm:$0xf]
        %v715 = vld [vmem:[%s7 + $0x4] sm:$0xf]
        %v716 = vld [vmem:[%s7 + $0x8] sm:$0xf]
        %v717 = vld [vmem:[%s7 + $0xc] sm:$0xf]
        %v718 = vld [vmem:[%s7 + $0x10] sm:$0xf]
        %v719 = vld [vmem:[%s7 + $0x14] sm:$0xf]
        %v720 = vld [vmem:[%s7 + $0x18] sm:$0xf]
        %v721 = vld [vmem:[%s7 + $0x1c] sm:$0xf]
        %v722 = vld [vmem:[%s8] sm:$0x1]
        %v724 = vlaneseq
        %v725 = vshrl.u32 %v724, 7
        %v726 = vsub.s32 0, %v725
        %v727 = vrot.slane %v722, %v726
        %v737 = vunpack.c.l.b16 %v714
        %v738 = vunpack.c.l.b16 %v715
        %v739 = vunpack.c.l.b16 %v716
        %v740 = vunpack.c.l.b16 %v717
        %v741 = vunpack.c.l.b16 %v718
        %v742 = vunpack.c.l.b16 %v719
        %v743 = vunpack.c.l.b16 %v720
        %v744 = vunpack.c.l.b16 %v721
        %v745 = vpack.c.b16 %v738, %v737
        %v746 = vpack.c.b16 %v740, %v739
        %v747 = vpack.c.b16 %v742, %v741
        %v748 = vpack.c.b16 %v744, %v743
        %v754 = vsel %vm580, %v713, 0
        %756 = vmatprep.subr.bf16.mxu0 0
        %757 = vmatpush1.bf16.msra.mxu0 %v745
        %758 = vmatprep.subr.bf16.mxu0 0
        %759 = vmatpush1.bf16.msra.mxu0 %v746
        %760 = vmatprep.subr.bf16.mxu0 0
        %761 = vmatpush1.bf16.msra.mxu0 %v747
        %762 = vmatprep.subr.bf16.mxu0 0
        %763 = vmatpush1.bf16.msra.mxu0 %v748
        %764 = vmatprep.subr.bf16.mxu0 0
        %765 = vmatpush1.bf16.msra.mxu0 0
        %766 = vmatprep.subr.bf16.mxu0 0
        %767 = vmatpush1.bf16.msra.mxu0 0
        %768 = vmatprep.subr.bf16.mxu0 0
        %769 = vmatpush1.bf16.msra.mxu0 0
        %770 = vmatprep.subr.bf16.mxu0 0
        %771 = vmatpush1.bf16.msra.mxu0 0
        %772 = vmatprep.subr.bf16.mxu0 0
        %773 = vmatpush1.bf16.msra.mxu0 0
        %774 = vmatprep.subr.bf16.mxu0 0
        %775 = vmatpush1.bf16.msra.mxu0 0
        %776 = vmatprep.subr.bf16.mxu0 0
        %777 = vmatpush1.bf16.msra.mxu0 0
        %778 = vmatprep.subr.bf16.mxu0 0
        %779 = vmatpush1.bf16.msra.mxu0 0
        %780 = vmatprep.subr.bf16.mxu0 0
        %781 = vmatpush1.bf16.msra.mxu0 0
        %782 = vmatprep.subr.bf16.mxu0 0
        %783 = vmatpush1.bf16.msra.mxu0 0
        %784 = vmatprep.subr.bf16.mxu0 0
        %785 = vmatpush1.bf16.msra.mxu0 0
        %786 = vmatprep.subr.bf16.mxu0 0
        %787 = vmatpush1.bf16.msra.mxu0 0
        %788 = vmatprep.mubr.bf16.mxu0 0
        %789 = vmatmul.mubr.bf16.gmra.mrb[0].mxu0 %v754
        %v790 = vpop.f32.mrb[0].mxu0
        %v791 = vadd.f32 %v727, %v790
        %v792 = vpop.f32.mrb[0].mxu0
        %v793 = vpop.f32.mrb[0].mxu0
        %v794 = vadd.f32 %v727, %v793
        %v795 = vpop.f32.mrb[0].mxu0
        %796 = vdwg.mxu0
        %v797 = vmax.f32 %v791, 0.0
        %v798 = vmax.f32 %v794, 0.0
        %v799 = vpack.c.bf16 %v798, %v797
        %v800 = vld [vmem:[%s9] sm:$0xf]
        %v801 = vld [vmem:[%s9 + $0x4] sm:$0xf]
        %v802 = vld [vmem:[%s9 + $0x8] sm:$0xf]
        %v803 = vld [vmem:[%s9 + $0xc] sm:$0xf]
        %v804 = vld [vmem:[%s9 + $0x10] sm:$0xf]
        %v805 = vld [vmem:[%s9 + $0x14] sm:$0xf]
        %v806 = vld [vmem:[%s9 + $0x18] sm:$0xf]
        %v807 = vld [vmem:[%s9 + $0x1c] sm:$0xf]
        %v808 = vld [vmem:[%s9 + $0x20] sm:$0xf]
        %v809 = vld [vmem:[%s9 + $0x24] sm:$0xf]
        %v810 = vld [vmem:[%s9 + $0x28] sm:$0xf]
        %v811 = vld [vmem:[%s9 + $0x2c] sm:$0xf]
        %v812 = vld [vmem:[%s9 + $0x30] sm:$0xf]
        %v813 = vld [vmem:[%s9 + $0x34] sm:$0xf]
        %v814 = vld [vmem:[%s9 + $0x38] sm:$0xf]
        %v815 = vld [vmem:[%s9 + $0x3c] sm:$0xf]
        %v816 = vld [vmem:[%s10] sm:$0x1]
        %v818 = vlaneseq
        %v819 = vshrl.u32 %v818, 7
        %v820 = vsub.s32 0, %v819
        %v821 = vrot.slane %v816, %v820
        %v839 = vunpack.c.l.b16 %v800
        %v840 = vunpack.c.l.b16 %v801
        %v841 = vunpack.c.l.b16 %v802
        %v842 = vunpack.c.l.b16 %v803
        %v843 = vunpack.c.l.b16 %v804
        %v844 = vunpack.c.l.b16 %v805
        %v845 = vunpack.c.l.b16 %v806
        %v846 = vunpack.c.l.b16 %v807
        %v847 = vunpack.c.l.b16 %v808
        %v848 = vunpack.c.l.b16 %v809
        %v849 = vunpack.c.l.b16 %v810
        %v850 = vunpack.c.l.b16 %v811
        %v851 = vunpack.c.l.b16 %v812
        %v852 = vunpack.c.l.b16 %v813
        %v853 = vunpack.c.l.b16 %v814
        %v854 = vunpack.c.l.b16 %v815
        %v855 = vpack.c.b16 %v840, %v839
        %v856 = vpack.c.b16 %v842, %v841
        %v857 = vpack.c.b16 %v844, %v843
        %v858 = vpack.c.b16 %v846, %v845
        %v859 = vpack.c.b16 %v848, %v847
        %v860 = vpack.c.b16 %v850, %v849
        %v861 = vpack.c.b16 %v852, %v851
        %v862 = vpack.c.b16 %v854, %v853
        %871 = vmatprep.subr.bf16.mxu0 0
        %872 = vmatpush1.bf16.msra.mxu0 %v855
        %873 = vmatprep.subr.bf16.mxu0 0
        %874 = vmatpush1.bf16.msra.mxu0 %v856
        %875 = vmatprep.subr.bf16.mxu0 0
        %876 = vmatpush1.bf16.msra.mxu0 %v857
        %877 = vmatprep.subr.bf16.mxu0 0
        %878 = vmatpush1.bf16.msra.mxu0 %v858
        %879 = vmatprep.subr.bf16.mxu0 0
        %880 = vmatpush1.bf16.msra.mxu0 %v859
        %881 = vmatprep.subr.bf16.mxu0 0
        %882 = vmatpush1.bf16.msra.mxu0 %v860
        %883 = vmatprep.subr.bf16.mxu0 0
        %884 = vmatpush1.bf16.msra.mxu0 %v861
        %885 = vmatprep.subr.bf16.mxu0 0
        %886 = vmatpush1.bf16.msra.mxu0 %v862
        %887 = vmatprep.subr.bf16.mxu0 0
        %888 = vmatpush1.bf16.msra.mxu0 0
        %889 = vmatprep.subr.bf16.mxu0 0
        %890 = vmatpush1.bf16.msra.mxu0 0
        %891 = vmatprep.subr.bf16.mxu0 0
        %892 = vmatpush1.bf16.msra.mxu0 0
        %893 = vmatprep.subr.bf16.mxu0 0
        %894 = vmatpush1.bf16.msra.mxu0 0
        %895 = vmatprep.subr.bf16.mxu0 0
        %896 = vmatpush1.bf16.msra.mxu0 0
        %897 = vmatprep.subr.bf16.mxu0 0
        %898 = vmatpush1.bf16.msra.mxu0 0
        %899 = vmatprep.subr.bf16.mxu0 0
        %900 = vmatpush1.bf16.msra.mxu0 0
        %901 = vmatprep.subr.bf16.mxu0 0
        %902 = vmatpush1.bf16.msra.mxu0 0
        %903 = vmatprep.mubr.bf16.mxu0 0
        %904 = vmatmul.mubr.bf16.gmra.mrb[0].mxu0 %v799
        %v905 = vpop.f32.mrb[0].mxu0
        %v906 = vadd.f32 %v821, %v905
        %v907 = vpop.f32.mrb[0].mxu0
        %v908 = vpop.f32.mrb[0].mxu0
        %v909 = vadd.f32 %v821, %v908
        %v910 = vpop.f32.mrb[0].mxu0
        %911 = vdwg.mxu0
        %v912 = vmax.f32 %v906, 0.0
        %v913 = vmax.f32 %v909, 0.0
        %v914 = vsel %vm580, %v912, -inf
        %v915 = vsel %vm580, %v913, -inf
        %v916 = vmax.f32 %v914, %v915
        %v917 = vrot.slane %v916, 4
        %v918 = vmax.f32 %v916, %v917
        %v919 = vrot.slane %v918, 2
        %v920 = vmax.f32 %v918, %v919
        %v921 = vrot.slane %v920, 1
        %v922 = vmax.f32 %v920, %v921
        %v923 = vld [vmem:[#allocation2] sm:$0x1]
        %v924 = vmax.f32 %v923, %v922
        %vm925 = vcmask 516096
        %926 = vst.msk [vmem:[#allocation2] sm:$0x1] %vm925, %v924
        // Predicated region
        $region69: #{tpu_custom_call.1} parent=63 // pred_check
          %p927 = pneg %p405
        $region70: #{tpu_custom_call.1} parent=63 // pred_check_branch
          %929 = sbr.rel (%p927) target = $region72
        $region71: #{tpu_custom_call.1} parent=63 // pred_region
          %v930 = vld [vmem:[#allocation2] sm:$0x1]
          %931 = vst.msk [vmem:[%s396] sm:$0x1] %vm925, %v930
        $region72: #{tpu_custom_call.1} parent=63 // pred_fallthru
          _
        %s932 = sand.u32 %s283, 1
        %s933 = scalar_lea.sflag [#allocation4], %s932
        %s934 = sand.u32 %s283, 1
        %s935 = scalar_lea.vmem [#allocation3], %s934
        // Predicated region
        $region73: #{tpu_custom_call.1} parent=63 // pred_check
          %p936 = pneg %p293
        $region74: #{tpu_custom_call.1} parent=63 // pred_check_branch
          %938 = sbr.rel (%p936) target = $region76
        $region75: #{tpu_custom_call.1} parent=63 // pred_region
          %s940 = ssub.s32 16, 16
          %941 = vsyncadd %s933, %s940
          %s942 = smul.addr %s29, 16
          %s943 = scalar_lea.hbm %s11, %s942
          %s945 = sshll.u32 %s935, 4
          %s946 = int_to_ptr.vmem [resolvable:$true] %s945
          %948 = dma.vmem_to_hbm [thread:$0]  %s946, 16, %s943, %s933
        $region76: #{tpu_custom_call.1} parent=63 // pred_fallthru
          _
      $region64: #{tpu_custom_call.1} parent=5 // pred_fallthru
        _
      %p949 = scmp.le.s32.totalorder 2, %s20
      // Predicated region
      $region77: #{tpu_custom_call.1} parent=5 // pred_check
        %p950 = pneg %p949
      $region78: #{tpu_custom_call.1} parent=5 // pred_check_branch
        %952 = sbr.rel (%p950) target = $region80
      $region79: #{tpu_custom_call.1} parent=5 // pred_region
        %s953 = ssub.s32 %s20, 2
        // Predicated region
        $region81: #{tpu_custom_call.1} parent=79 // pred_check
          %p954 = pneg %p299
        $region82: #{tpu_custom_call.1} parent=79 // pred_check_branch
          %956 = sbr.rel (%p954) target = $region84
        $region83: #{tpu_custom_call.1} parent=79 // pred_region
          %s957 = sand.u32 %s284, 1
          %s958 = scalar_lea.sflag [#allocation4], %s957
          %s959 = sand.u32 %s284, 1
          %s960 = scalar_lea.vmem [#allocation3], %s959
          %961 = dma.done %s958, 16
        $region84: #{tpu_custom_call.1} parent=79 // pred_fallthru
          _
      $region80: #{tpu_custom_call.1} parent=5 // pred_fallthru
        _
    $region6: #{tpu_custom_call.1} parent=1 // loop_footer
      %s24 = sadd.s32 1, %s20
    $region7: #{tpu_custom_call.1} parent=1 // loop_footer_branch
      %19 = sbr.rel target = $region3
    $region8: #{tpu_custom_call.1} parent=1 // loop_exit
      _
    %962 = vsyncpa [#allocation4], 1
    %s963 = scalar_lea.sflag [#allocation4], 1
    %964 = vsyncpa %s963, 1

</llo_original>
